<compile_context>
chip_gen: v7x
topology: tpu7x:2x2x1
jax: 0.10.0
libtpu: 0.0.40
codegen_flags: <defaults>
</compile_context>

<pallas_src>
import functools

import jax
import jax.numpy as jnp
from jax.experimental import pallas as pl
from jax.experimental.pallas import tpu as pltpu

_HIDDEN = 64  # per-head hidden width (matches nn.Linear(embedding_dim, 64))


def _fused_heads_kernel(x_ref, w1_ref, b1_ref, w2_ref, b2_ref, o_ref):
    """sigmoid(relu(x @ W1_cat + b1) @ W2_blockdiag + b2), all in VMEM."""
    x = x_ref[...]
    # Layer 1 (all three heads at once): [tb, E] @ [E, 192] -> f32 accum.
    h = jnp.dot(x, w1_ref[...], preferred_element_type=jnp.float32)
    h = h + b1_ref[...].astype(jnp.float32)
    h = jnp.maximum(h, 0.0)                                   # ReLU (VPU)
    # Layer 2 (block-diagonal): [tb, 192] @ [192, out_pad] -> f32 accum.
    y = jnp.dot(h.astype(w2_ref.dtype), w2_ref[...],
                preferred_element_type=jnp.float32)
    y = y + b2_ref[...].astype(jnp.float32)
    o_ref[...] = jax.nn.sigmoid(y).astype(o_ref.dtype)        # Sigmoid (EUP)


def _run_fused(x, w1, b1, w2, b2):
    B, E = x.shape
    H3 = w1.shape[1]          # 3 * 64 = 192
    out_pad = w2.shape[1]     # padded to multiple of 128 (lane-dense output)

    # Batch tiling: whole batch in one block when small; 128-row blocks (padded
    # if needed) when large so megacore / pipelining can kick in.
    if B <= 128:
        tb, B_pad = B, B
        x_in = x
    else:
        tb = 128
        B_pad = ((B + tb - 1) // tb) * tb
        x_in = x if B_pad == B else jnp.pad(x, ((0, B_pad - B), (0, 0)))

    out = pl.pallas_call(
        _fused_heads_kernel,
        out_shape=jax.ShapeDtypeStruct((B_pad, out_pad), x.dtype),
        grid=(B_pad // tb,),
        in_specs=[
            pl.BlockSpec((tb, E), lambda i: (i, 0)),
            pl.BlockSpec((E, H3), lambda i: (0, 0)),
            pl.BlockSpec((1, H3), lambda i: (0, 0)),
            pl.BlockSpec((H3, out_pad), lambda i: (0, 0)),
            pl.BlockSpec((1, out_pad), lambda i: (0, 0)),
        ],
        out_specs=pl.BlockSpec((tb, out_pad), lambda i: (i, 0)),
        compiler_params=pltpu.CompilerParams(
            dimension_semantics=("parallel",)),
    )(x_in, w1, b1, w2, b2)

    return out[:B] if B_pad != B else out


def init_multi_task_heads(key, embedding_dim, num_categories, num_skus,
                          dtype=jnp.float32):
    """PyTorch-Linear-like init, then fuse into concatenated / block-diag params.

    Returns dict with:
      "heads": per-head (w1, b1, w2, b2) tuples (for reference checking)
      "fused": (W1_cat [E,192], b1_cat [1,192],
                W2_bd [192,out_pad], b2_cat [1,out_pad])
    """
    def linear_params(k, fan_in, fan_out):
        k_w, k_b = jax.random.split(k)
        bound = 1.0 / jnp.sqrt(fan_in)
        w = jax.random.uniform(k_w, (fan_in, fan_out), dtype, -bound, bound)
        b = jax.random.uniform(k_b, (1, fan_out), dtype, -bound, bound)
        return w, b

    H = _HIDDEN
    out_dims = (1, num_categories, num_skus)
    keys = jax.random.split(key, 6)
    heads = {}
    for idx, (name, out_dim) in enumerate(
            zip(("churn", "category", "sku"), out_dims)):
        w1, b1 = linear_params(keys[2 * idx], embedding_dim, H)
        w2, b2 = linear_params(keys[2 * idx + 1], H, out_dim)
        heads[name] = (w1, b1, w2, b2)

    # --- one-time fusion (done at init, outside the kernel hot path) ---
    w1_cat = jnp.concatenate([heads[n][0] for n in ("churn", "category", "sku")],
                             axis=1)                      # [E, 3H]
    b1_cat = jnp.concatenate([heads[n][1] for n in ("churn", "category", "sku")],
                             axis=1)                      # [1, 3H]

    total_out = sum(out_dims)                             # 1 + C + S
    out_pad = ((total_out + 127) // 128) * 128            # lane-dense width
    w2_bd = jnp.zeros((3 * H, out_pad), dtype)
    b2_cat = jnp.zeros((1, out_pad), dtype)
    col = 0
    for idx, name in enumerate(("churn", "category", "sku")):
        w2, b2 = heads[name][2], heads[name][3]
        od = w2.shape[1]
        w2_bd = w2_bd.at[idx * H:(idx + 1) * H, col:col + od].set(w2)
        b2_cat = b2_cat.at[:, col:col + od].set(b2)
        col += od

    return {"heads": heads, "fused": (w1_cat, b1_cat, w2_bd, b2_cat)}


@functools.partial(jax.jit, static_argnames=("num_categories", "num_skus"))
def multi_task_heads_forward(user_emb, fused_params, *, num_categories,
                             num_skus):
    out = _run_fused(user_emb, *fused_params)             # [B, out_pad]
    churn = out[:, 0:1]
    category = out[:, 1:1 + num_categories]
    sku = out[:, 1 + num_categories:1 + num_categories + num_skus]
    return churn, category, sku


if __name__ == "__main__":
    # Small, module-consistent shapes.
    batch = 8
    embedding_dim = 32
    num_categories = 16
    num_skus = 128

    key = jax.random.PRNGKey(0)
    k_params, k_x = jax.random.split(key)

    params = init_multi_task_heads(k_params, embedding_dim, num_categories,
                                   num_skus)
    user_emb = jax.random.normal(k_x, (batch, embedding_dim), jnp.float32)

    churn, category, sku = multi_task_heads_forward(
        user_emb, params["fused"],
        num_categories=num_categories, num_skus=num_skus)
    jax.block_until_ready((churn, category, sku))

    # Sanity: shapes match the PyTorch module's outputs.
    assert churn.shape == (batch, 1)
    assert category.shape == (batch, num_categories)
    assert sku.shape == (batch, num_skus)

    # Reference check in plain JAX against the ORIGINAL per-head params.
    def ref_head(x, w1, b1, w2, b2):
        h = jnp.maximum(x @ w1 + b1, 0.0)
        return jax.nn.sigmoid(h @ w2 + b2)

    import numpy as np
    np.testing.assert_allclose(
        np.asarray(churn), np.asarray(ref_head(user_emb, *params["heads"]["churn"])),
        rtol=1e-5, atol=1e-5)
    np.testing.assert_allclose(
        np.asarray(category),
        np.asarray(ref_head(user_emb, *params["heads"]["category"])),
        rtol=1e-5, atol=1e-5)
    np.testing.assert_allclose(
        np.asarray(sku), np.asarray(ref_head(user_emb, *params["heads"]["sku"])),
        rtol=1e-5, atol=1e-5)

    print("KERNEL_OK")
</pallas_src>

<mosaic_0001>
module attributes {stable_mosaic.version = 11 : i64} {
  func.func @_fused_heads_kernel(%arg0: i32, %arg1: memref<8x32xf32, #tpu.memory_space<vmem>>, %arg2: memref<32x192xf32, #tpu.memory_space<vmem>>, %arg3: memref<1x192xf32, #tpu.memory_space<vmem>>, %arg4: memref<192x256xf32, #tpu.memory_space<vmem>>, %arg5: memref<1x256xf32, #tpu.memory_space<vmem>>, %arg6: memref<8x256xf32, #tpu.memory_space<vmem>>) attributes {dimension_semantics = [#tpu.dimension_semantics<parallel>], iteration_bounds = array<i64: 1>, scalar_prefetch = 0 : i64, scratch_operands = 0 : i64, tpu.core_type = #tpu.core_type<tc>, window_params = [{transform_indices = @transform_0, window_bounds = array<i64: 8, 32>}, {pipeline_mode = #tpu.pipeline_mode<synchronous>, transform_indices = @transform_1, window_bounds = array<i64: 32, 192>}, {pipeline_mode = #tpu.pipeline_mode<synchronous>, transform_indices = @transform_2, window_bounds = array<i64: 1, 192>}, {pipeline_mode = #tpu.pipeline_mode<synchronous>, transform_indices = @transform_3, window_bounds = array<i64: 192, 256>}, {pipeline_mode = #tpu.pipeline_mode<synchronous>, transform_indices = @transform_4, window_bounds = array<i64: 1, 256>}, {transform_indices = @transform_5, window_bounds = array<i64: 8, 256>}]} {
    %c0 = arith.constant 0 : index
    %c0_0 = arith.constant 0 : index
    %0 = vector.load %arg1[%c0, %c0_0] : memref<8x32xf32, #tpu.memory_space<vmem>>, vector<8x32xf32>
    %c0_1 = arith.constant 0 : index
    %c0_2 = arith.constant 0 : index
    %1 = vector.load %arg2[%c0_1, %c0_2] : memref<32x192xf32, #tpu.memory_space<vmem>>, vector<32x192xf32>
    %cst = arith.constant dense<0.000000e+00> : vector<8x192xf32>
    %2 = tpu.matmul %0, %1, %cst {dimension_numbers = #tpu.dot_dimension_numbers<[1], [0], [0], [1], [0, 0, 1, 1], [], []>} : vector<8x32xf32>, vector<32x192xf32>, vector<8x192xf32> -> vector<8x192xf32>
    %c0_3 = arith.constant 0 : index
    %c0_4 = arith.constant 0 : index
    %3 = vector.load %arg3[%c0_3, %c0_4] : memref<1x192xf32, #tpu.memory_space<vmem>>, vector<1x192xf32>
    %4 = vector.broadcast %3 : vector<1x192xf32> to vector<8x192xf32>
    %5 = arith.addf %2, %4 : vector<8x192xf32>
    %cst_5 = arith.constant 0.000000e+00 : f32
    %6 = vector.broadcast %cst_5 : f32 to vector<8x192xf32>
    %7 = arith.maximumf %5, %6 : vector<8x192xf32>
    %c0_6 = arith.constant 0 : index
    %c0_7 = arith.constant 0 : index
    %8 = vector.load %arg4[%c0_6, %c0_7] : memref<192x256xf32, #tpu.memory_space<vmem>>, vector<192x256xf32>
    %cst_8 = arith.constant dense<0.000000e+00> : vector<8x256xf32>
    %9 = tpu.matmul %7, %8, %cst_8 {dimension_numbers = #tpu.dot_dimension_numbers<[1], [0], [0], [1], [0, 0, 1, 1], [], []>} : vector<8x192xf32>, vector<192x256xf32>, vector<8x256xf32> -> vector<8x256xf32>
    %c0_9 = arith.constant 0 : index
    %c0_10 = arith.constant 0 : index
    %10 = vector.load %arg5[%c0_9, %c0_10] : memref<1x256xf32, #tpu.memory_space<vmem>>, vector<1x256xf32>
    %11 = vector.broadcast %10 : vector<1x256xf32> to vector<8x256xf32>
    %12 = arith.addf %9, %11 : vector<8x256xf32>
    %13 = arith.negf %12 : vector<8x256xf32>
    %14 = math.exp %13 : vector<8x256xf32>
    %cst_11 = arith.constant 1.000000e+00 : f32
    %15 = vector.broadcast %cst_11 : f32 to vector<8x256xf32>
    %16 = arith.addf %15, %14 : vector<8x256xf32>
    %17 = arith.divf %15, %16 : vector<8x256xf32>
    %c0_12 = arith.constant 0 : index
    %c0_13 = arith.constant 0 : index
    %18 = vector.load %arg6[%c0_12, %c0_13] : memref<8x256xf32, #tpu.memory_space<vmem>>, vector<8x256xf32>
    tpu.vector_store %arg6[%c0_12, %c0_13], %17 {strides = array<i32>} : memref<8x256xf32, #tpu.memory_space<vmem>>, vector<8x256xf32>,
    return
  }
  func.func @transform_0(%arg0: i32) -> (i32, i32) {
    %c0_i32 = arith.constant 0 : i32
    %c0_i32_0 = arith.constant 0 : i32
    return %arg0, %c0_i32 : i32, i32
  }
  func.func @transform_1(%arg0: i32) -> (i32, i32) {
    %c0_i32 = arith.constant 0 : i32
    %c0_i32_0 = arith.constant 0 : i32
    %c0_i32_1 = arith.constant 0 : i32
    return %c0_i32, %c0_i32_0 : i32, i32
  }
  func.func @transform_2(%arg0: i32) -> (i32, i32) {
    %c0_i32 = arith.constant 0 : i32
    %c0_i32_0 = arith.constant 0 : i32
    %c0_i32_1 = arith.constant 0 : i32
    return %c0_i32, %c0_i32_0 : i32, i32
  }
  func.func @transform_3(%arg0: i32) -> (i32, i32) {
    %c0_i32 = arith.constant 0 : i32
    %c0_i32_0 = arith.constant 0 : i32
    %c0_i32_1 = arith.constant 0 : i32
    return %c0_i32, %c0_i32_0 : i32, i32
  }
  func.func @transform_4(%arg0: i32) -> (i32, i32) {
    %c0_i32 = arith.constant 0 : i32
    %c0_i32_0 = arith.constant 0 : i32
    %c0_i32_1 = arith.constant 0 : i32
    return %c0_i32, %c0_i32_0 : i32, i32
  }
  func.func @transform_5(%arg0: i32) -> (i32, i32) {
    %c0_i32 = arith.constant 0 : i32
    %c0_i32_0 = arith.constant 0 : i32
    return %arg0, %c0_i32 : i32, i32
  }
}

</mosaic_0001>

<llo_original>
// kernel: multi_task_heads_forward.1
$region0: #{multi_task_heads_forward.1}
  #allocation0 [shape = 'u32[]', space=smem, size = 0x4, offset = 0x4, fixed_abs, tag = 'smem constant byte address 0x4 - core index']
  #allocation1 [shape = 'u32[144,128]{1,0:T(1,128)}', space=vmem, size = 0x12000, scoped, tag = 'internal scratch']
  %s0 = inlined_call_operand.hbm [shape: f32[8,32], index: 0, kind: input, shape index: {}]
  %s1 = inlined_call_operand.hbm [shape: f32[32,192], index: 1, kind: input, shape index: {}]
  %s2 = inlined_call_operand.vmem [shape: f32[1,192], index: 2, kind: input, shape index: {}]
  %s3 = inlined_call_operand.hbm [shape: f32[192,256], index: 3, kind: input, shape index: {}]
  %s4 = inlined_call_operand.hbm [shape: f32[1,256], index: 4, kind: input, shape index: {}]
  %s5 = inlined_call_operand.vmem [shape: f32[8,256], index: 5, kind: output, shape index: {}]
  %s6 = sld [smem:[#allocation0]]
  $region46: #{multi_task_heads_forward.1} parent=0
    _
  %s8 = ssub.s32 1, %s6
  %s9 = scalar_select 0, %s8, %s6
  $region1: #{multi_task_heads_forward.1} parent=0
    #allocation2 [shape = 'u8[4096]{0}', space=vmem, size = 0x1000, scoped, tag = 'input window, operand 0, single buffered']
    #allocation3 [shape = 's32[1]{0}', space=sflag, size = 0x4, scoped, tag = 'scoped memory for multi_task_heads_forward.1']
    #allocation4 [shape = 'u8[32768]{0}', space=vmem, size = 0x8000, scoped, tag = 'input window, operand 1, single buffered']
    #allocation5 [shape = 's32[1]{0}', space=sflag, size = 0x4, scoped, tag = 'scoped memory for multi_task_heads_forward.1']
    #allocation6 [shape = 'u8[196608]{0}', space=vmem, size = 0x30000, scoped, tag = 'input window, operand 3, single buffered']
    #allocation7 [shape = 'u8[1024]{0}', space=vmem, size = 0x400, scoped, tag = 'input window, operand 4, single buffered']
    #allocation8 [shape = 's32[1]{0}', space=sflag, size = 0x4, scoped, tag = 'scoped memory for multi_task_heads_forward.1']
    %10 = vsyncpa [#allocation3], 0
    %11 = vsyncpa [#allocation5], 0
    %12 = vsyncpa [#allocation8], 0
    // Predicated region
    $region2: #{multi_task_heads_forward.1} parent=1 // pred_check
      _
    $region3: #{multi_task_heads_forward.1} parent=1 // pred_check_branch
      %14 = sbr.rel (0) target = $region5
    $region4: #{multi_task_heads_forward.1} parent=1 // pred_region
      %s16 = ssub.s32 128, 128
      %17 = vsyncadd [#allocation3], %s16
      %s19 = sshll.u32 [#allocation2], 4
      %s20 = int_to_ptr.vmem [resolvable:$true] %s19
      %22 = dma.hbm_to_vmem [thread:$0]  %s0, 128, %s20, [#allocation3]
    $region5: #{multi_task_heads_forward.1} parent=1 // pred_fallthru
      _
    // Predicated region
    $region6: #{multi_task_heads_forward.1} parent=1 // pred_check
      _
    $region7: #{multi_task_heads_forward.1} parent=1 // pred_check_branch
      %24 = sbr.rel (0) target = $region9
    $region8: #{multi_task_heads_forward.1} parent=1 // pred_region
      %s26 = ssub.s32 1024, 1024
      %27 = vsyncadd [#allocation5], %s26
      %s28 = sshll.u32 [#allocation4], 4
      %s29 = int_to_ptr.vmem [resolvable:$true] %s28
      %34 = dma.hbm_to_vmem [thread:$0]  %s1, 1024, %s29, [#allocation5], 256, 256, 16
    $region9: #{multi_task_heads_forward.1} parent=1 // pred_fallthru
      _
    // Predicated region
    $region10: #{multi_task_heads_forward.1} parent=1 // pred_check
      _
    $region11: #{multi_task_heads_forward.1} parent=1 // pred_check_branch
      %36 = sbr.rel (0) target = $region13
    $region12: #{multi_task_heads_forward.1} parent=1 // pred_region
      _
    $region13: #{multi_task_heads_forward.1} parent=1 // pred_fallthru
      _
    // Predicated region
    $region14: #{multi_task_heads_forward.1} parent=1 // pred_check
      _
    $region15: #{multi_task_heads_forward.1} parent=1 // pred_check_branch
      %38 = sbr.rel (0) target = $region17
    $region16: #{multi_task_heads_forward.1} parent=1 // pred_region
      %s40 = ssub.s32 6144, 6144
      %41 = vsyncadd [#allocation5], %s40
      %s42 = sshll.u32 [#allocation6], 4
      %s43 = int_to_ptr.vmem [resolvable:$true] %s42
      %48 = dma.hbm_to_vmem [thread:$0]  %s3, 6144, %s43, [#allocation5], 256, 256, 16
    $region17: #{multi_task_heads_forward.1} parent=1 // pred_fallthru
      _
    // Predicated region
    $region18: #{multi_task_heads_forward.1} parent=1 // pred_check
      _
    $region19: #{multi_task_heads_forward.1} parent=1 // pred_check_branch
      %50 = sbr.rel (0) target = $region21
    $region20: #{multi_task_heads_forward.1} parent=1 // pred_region
      %s52 = ssub.s32 32, 32
      %53 = vsyncadd [#allocation8], %s52
      %s55 = sshll.u32 [#allocation7], 4
      %s56 = int_to_ptr.vmem [resolvable:$true] %s55
      %58 = dma.hbm_to_vmem [thread:$0]  %s4, 32, %s56, [#allocation8]
    $region21: #{multi_task_heads_forward.1} parent=1 // pred_fallthru
      _
    // Predicated region
    $region22: #{multi_task_heads_forward.1} parent=1 // pred_check
      _
    $region23: #{multi_task_heads_forward.1} parent=1 // pred_check_branch
      %60 = sbr.rel (0) target = $region25
    $region24: #{multi_task_heads_forward.1} parent=1 // pred_region
      %61 = dma.done [#allocation3], 128
    $region25: #{multi_task_heads_forward.1} parent=1 // pred_fallthru
      _
    // Predicated region
    $region26: #{multi_task_heads_forward.1} parent=1 // pred_check
      _
    $region27: #{multi_task_heads_forward.1} parent=1 // pred_check_branch
      %63 = sbr.rel (0) target = $region29
    $region28: #{multi_task_heads_forward.1} parent=1 // pred_region
      %64 = dma.done [#allocation5], 1024
    $region29: #{multi_task_heads_forward.1} parent=1 // pred_fallthru
      _
    // Predicated region
    $region30: #{multi_task_heads_forward.1} parent=1 // pred_check
      _
    $region31: #{multi_task_heads_forward.1} parent=1 // pred_check_branch
      %66 = sbr.rel (0) target = $region33
    $region32: #{multi_task_heads_forward.1} parent=1 // pred_region
      %67 = dma.done [#allocation5], 6144
    $region33: #{multi_task_heads_forward.1} parent=1 // pred_fallthru
      _
    // Predicated region
    $region34: #{multi_task_heads_forward.1} parent=1 // pred_check
      _
    $region35: #{multi_task_heads_forward.1} parent=1 // pred_check_branch
      %69 = sbr.rel (0) target = $region37
    $region36: #{multi_task_heads_forward.1} parent=1 // pred_region
      %70 = dma.done [#allocation8], 32
    $region37: #{multi_task_heads_forward.1} parent=1 // pred_fallthru
      _
    %v71 = vld [vmem:[#allocation2] sm:$0xff]
    %v72 = vld [vmem:[#allocation4] sm:$0xff]
    %v73 = vld [vmem:[#allocation4 + $0x8] sm:$0xff]
    %v74 = vld [vmem:[#allocation4 + $0x10] sm:$0xff]
    %v75 = vld [vmem:[#allocation4 + $0x18] sm:$0xff]
    %v76 = vld [vmem:[#allocation4 + $0x20] sm:$0xff]
    %v77 = vld [vmem:[#allocation4 + $0x28] sm:$0xff]
    %v78 = vld [vmem:[#allocation4 + $0x30] sm:$0xff]
    %v79 = vld [vmem:[#allocation4 + $0x38] sm:$0xff]
    %v80 = vld [vmem:[%s2] sm:$0x3]
    %v82 = vlaneseq
    %v83 = vshrl.u32 %v82, 7
    %v84 = vsub.s32 0, %v83
    %v85 = vrot.slane %v80, %v84
    %v86 = vlaneseq
    %v87 = vshrl.u32 %v86, 7
    %v88 = vsub.s32 1, %v87
    %v89 = vrot.slane %v80, %v88
    %vm92 = vcmask 261120
    %v94 = vsel %vm92, %v71, 0
    %96 = vmatprep.subr.mxu0 %v73
    %97 = vmatpush1.msra.mxu0 %v72
    %98 = vmatprep.subr.mxu0 %v75
    %99 = vmatpush1.msra.mxu0 %v74
    %100 = vmatprep.subr.mxu0 %v77
    %101 = vmatpush1.msra.mxu0 %v76
    %102 = vmatprep.subr.mxu0 %v79
    %103 = vmatpush1.msra.mxu0 %v78
    %104 = vmatprep.subr.mxu0 0.0
    %105 = vmatpush1.msra.mxu0 0.0
    %106 = vmatprep.subr.mxu0 0.0
    %107 = vmatpush1.msra.mxu0 0.0
    %108 = vmatprep.subr.mxu0 0.0
    %109 = vmatpush1.msra.mxu0 0.0
    %110 = vmatprep.subr.mxu0 0.0
    %111 = vmatpush1.msra.mxu0 0.0
    %112 = vmatprep.subr.mxu0 0.0
    %113 = vmatpush1.msra.mxu0 0.0
    %114 = vmatprep.subr.mxu0 0.0
    %115 = vmatpush1.msra.mxu0 0.0
    %116 = vmatprep.subr.mxu0 0.0
    %117 = vmatpush1.msra.mxu0 0.0
    %118 = vmatprep.subr.mxu0 0.0
    %119 = vmatpush1.msra.mxu0 0.0
    %120 = vmatprep.subr.mxu0 0.0
    %121 = vmatpush1.msra.mxu0 0.0
    %122 = vmatprep.subr.mxu0 0.0
    %123 = vmatpush1.msra.mxu0 0.0
    %124 = vmatprep.subr.mxu0 0.0
    %125 = vmatpush1.msra.mxu0 0.0
    %126 = vmatprep.subr.mxu0 0.0
    %127 = vmatpush1.msra.mxu0 0.0
    %128 = vmatprep.subr.mxu0 0.0
    %129 = vmatpush1.msra.mxu0 0.0
    %130 = vmatprep.subr.mxu0 0.0
    %131 = vmatpush1.msra.mxu0 0.0
    %132 = vmatprep.subr.mxu0 0.0
    %133 = vmatpush1.msra.mxu0 0.0
    %134 = vmatprep.subr.mxu0 0.0
    %135 = vmatpush1.msra.mxu0 0.0
    %136 = vmatprep.subr.mxu0 0.0
    %137 = vmatpush1.msra.mxu0 0.0
    %138 = vmatprep.subr.mxu0 0.0
    %139 = vmatpush1.msra.mxu0 0.0
    %140 = vmatprep.subr.mxu0 0.0
    %141 = vmatpush1.msra.mxu0 0.0
    %142 = vmatprep.subr.mxu0 0.0
    %143 = vmatpush1.msra.mxu0 0.0
    %144 = vmatprep.subr.mxu0 0.0
    %145 = vmatpush1.msra.mxu0 0.0
    %146 = vmatprep.subr.mxu0 0.0
    %147 = vmatpush1.msra.mxu0 0.0
    %148 = vmatprep.subr.mxu0 0.0
    %149 = vmatpush1.msra.mxu0 0.0
    %150 = vmatprep.subr.mxu0 0.0
    %151 = vmatpush1.msra.mxu0 0.0
    %152 = vmatprep.subr.mxu0 0.0
    %153 = vmatpush1.msra.mxu0 0.0
    %154 = vmatprep.subr.mxu0 0.0
    %155 = vmatpush1.msra.mxu0 0.0
    %156 = vmatprep.subr.mxu0 0.0
    %157 = vmatpush1.msra.mxu0 0.0
    %158 = vmatprep.subr.mxu0 0.0
    %159 = vmatpush1.msra.mxu0 0.0
    %160 = vmatprep.mubr.f32.mxu0 0.0
    %161 = vmatmul.mubr.f32.gmra.mrb[0].mxu0 %v94
    %v162 = vpop.f32.mrb[0].mxu0
    %v163 = vadd.f32 %v85, %v162
    %v164 = vpop.f32.mrb[0].mxu0
    %v165 = vadd.f32 %v89, %v164
    %166 = vdwg.mxu0
    %v167 = vmax.f32 %v163, 0.0
    %v168 = vmax.f32 %v165, 0.0
    %v169 = vld [vmem:[#allocation6] sm:$0xff]
    %v170 = vld [vmem:[#allocation6 + $0x8] sm:$0xff]
    %v171 = vld [vmem:[#allocation6 + $0x10] sm:$0xff]
    %v172 = vld [vmem:[#allocation6 + $0x18] sm:$0xff]
    %v173 = vld [vmem:[#allocation6 + $0x20] sm:$0xff]
    %v174 = vld [vmem:[#allocation6 + $0x28] sm:$0xff]
    %v175 = vld [vmem:[#allocation6 + $0x30] sm:$0xff]
    %v176 = vld [vmem:[#allocation6 + $0x38] sm:$0xff]
    %v177 = vld [vmem:[#allocation6 + $0x40] sm:$0xff]
    %v178 = vld [vmem:[#allocation6 + $0x48] sm:$0xff]
    %v179 = vld [vmem:[#allocation6 + $0x50] sm:$0xff]
    %v180 = vld [vmem:[#allocation6 + $0x58] sm:$0xff]
    %v181 = vld [vmem:[#allocation6 + $0x60] sm:$0xff]
    %v182 = vld [vmem:[#allocation6 + $0x68] sm:$0xff]
    %v183 = vld [vmem:[#allocation6 + $0x70] sm:$0xff]
    %v184 = vld [vmem:[#allocation6 + $0x78] sm:$0xff]
    %v185 = vld [vmem:[#allocation6 + $0x80] sm:$0xff]
    %v186 = vld [vmem:[#allocation6 + $0x88] sm:$0xff]
    %v187 = vld [vmem:[#allocation6 + $0x90] sm:$0xff]
    %v188 = vld [vmem:[#allocation6 + $0x98] sm:$0xff]
    %v189 = vld [vmem:[#allocation6 + $0xa0] sm:$0xff]
    %v190 = vld [vmem:[#allocation6 + $0xa8] sm:$0xff]
    %v191 = vld [vmem:[#allocation6 + $0xb0] sm:$0xff]
    %v192 = vld [vmem:[#allocation6 + $0xb8] sm:$0xff]
    %v193 = vld [vmem:[#allocation6 + $0xc0] sm:$0xff]
    %v194 = vld [vmem:[#allocation6 + $0xc8] sm:$0xff]
    %v195 = vld [vmem:[#allocation6 + $0xd0] sm:$0xff]
    %v196 = vld [vmem:[#allocation6 + $0xd8] sm:$0xff]
    %v197 = vld [vmem:[#allocation6 + $0xe0] sm:$0xff]
    %v198 = vld [vmem:[#allocation6 + $0xe8] sm:$0xff]
    %v199 = vld [vmem:[#allocation6 + $0xf0] sm:$0xff]
    %v200 = vld [vmem:[#allocation6 + $0xf8] sm:$0xff]
    %v201 = vld [vmem:[#allocation6 + $0x100] sm:$0xff]
    %v202 = vld [vmem:[#allocation6 + $0x108] sm:$0xff]
    %v203 = vld [vmem:[#allocation6 + $0x110] sm:$0xff]
    %v204 = vld [vmem:[#allocation6 + $0x118] sm:$0xff]
    %v205 = vld [vmem:[#allocation6 + $0x120] sm:$0xff]
    %v206 = vld [vmem:[#allocation6 + $0x128] sm:$0xff]
    %v207 = vld [vmem:[#allocation6 + $0x130] sm:$0xff]
    %v208 = vld [vmem:[#allocation6 + $0x138] sm:$0xff]
    %v209 = vld [vmem:[#allocation6 + $0x140] sm:$0xff]
    %v210 = vld [vmem:[#allocation6 + $0x148] sm:$0xff]
    %v211 = vld [vmem:[#allocation6 + $0x150] sm:$0xff]
    %v212 = vld [vmem:[#allocation6 + $0x158] sm:$0xff]
    %v213 = vld [vmem:[#allocation6 + $0x160] sm:$0xff]
    %v214 = vld [vmem:[#allocation6 + $0x168] sm:$0xff]
    %v215 = vld [vmem:[#allocation6 + $0x170] sm:$0xff]
    %v216 = vld [vmem:[#allocation6 + $0x178] sm:$0xff]
    %v217 = vld [vmem:[#allocation7] sm:$0x3]
    %v219 = vlaneseq
    %v220 = vshrl.u32 %v219, 7
    %v221 = vsub.s32 0, %v220
    %v222 = vrot.slane %v217, %v221
    %v223 = vlaneseq
    %v224 = vshrl.u32 %v223, 7
    %v225 = vsub.s32 1, %v224
    %v226 = vrot.slane %v217, %v225
    %vm229 = vcmask 523264
    %v231 = vsel %vm229, %v168, 0
    %233 = vmatprep.subr.mxu0 %v170
    %234 = vmatpush1.msra.mxu0 %v169
    %235 = vmatprep.subr.mxu0 %v172
    %236 = vmatpush1.msra.mxu0 %v171
    %237 = vmatprep.subr.mxu0 %v174
    %238 = vmatpush1.msra.mxu0 %v173
    %239 = vmatprep.subr.mxu0 %v176
    %240 = vmatpush1.msra.mxu0 %v175
    %241 = vmatprep.subr.mxu0 %v178
    %242 = vmatpush1.msra.mxu0 %v177
    %243 = vmatprep.subr.mxu0 %v180
    %244 = vmatpush1.msra.mxu0 %v179
    %245 = vmatprep.subr.mxu0 %v182
    %246 = vmatpush1.msra.mxu0 %v181
    %247 = vmatprep.subr.mxu0 %v184
    %248 = vmatpush1.msra.mxu0 %v183
    %249 = vmatprep.subr.mxu0 %v186
    %250 = vmatpush1.msra.mxu0 %v185
    %251 = vmatprep.subr.mxu0 %v188
    %252 = vmatpush1.msra.mxu0 %v187
    %253 = vmatprep.subr.mxu0 %v190
    %254 = vmatpush1.msra.mxu0 %v189
    %255 = vmatprep.subr.mxu0 %v192
    %256 = vmatpush1.msra.mxu0 %v191
    %257 = vmatprep.subr.mxu0 %v194
    %258 = vmatpush1.msra.mxu0 %v193
    %259 = vmatprep.subr.mxu0 %v196
    %260 = vmatpush1.msra.mxu0 %v195
    %261 = vmatprep.subr.mxu0 %v198
    %262 = vmatpush1.msra.mxu0 %v197
    %263 = vmatprep.subr.mxu0 %v200
    %264 = vmatpush1.msra.mxu0 %v199
    %265 = vmatprep.subr.mxu0 %v202
    %266 = vmatpush1.msra.mxu0 %v201
    %267 = vmatprep.subr.mxu0 %v204
    %268 = vmatpush1.msra.mxu0 %v203
    %269 = vmatprep.subr.mxu0 %v206
    %270 = vmatpush1.msra.mxu0 %v205
    %271 = vmatprep.subr.mxu0 %v208
    %272 = vmatpush1.msra.mxu0 %v207
    %273 = vmatprep.subr.mxu0 %v210
    %274 = vmatpush1.msra.mxu0 %v209
    %275 = vmatprep.subr.mxu0 %v212
    %276 = vmatpush1.msra.mxu0 %v211
    %277 = vmatprep.subr.mxu0 %v214
    %278 = vmatpush1.msra.mxu0 %v213
    %279 = vmatprep.subr.mxu0 %v216
    %280 = vmatpush1.msra.mxu0 %v215
    %281 = vmatprep.subr.mxu0 0.0
    %282 = vmatpush1.msra.mxu0 0.0
    %283 = vmatprep.subr.mxu0 0.0
    %284 = vmatpush1.msra.mxu0 0.0
    %285 = vmatprep.subr.mxu0 0.0
    %286 = vmatpush1.msra.mxu0 0.0
    %287 = vmatprep.subr.mxu0 0.0
    %288 = vmatpush1.msra.mxu0 0.0
    %289 = vmatprep.subr.mxu0 0.0
    %290 = vmatpush1.msra.mxu0 0.0
    %291 = vmatprep.subr.mxu0 0.0
    %292 = vmatpush1.msra.mxu0 0.0
    %293 = vmatprep.subr.mxu0 0.0
    %294 = vmatpush1.msra.mxu0 0.0
    %295 = vmatprep.subr.mxu0 0.0
    %296 = vmatpush1.msra.mxu0 0.0
    %297 = vmatprep.mubr.f32.mxu0 %v231
    %298 = vmatmul.mubr.f32.gmra.mrb[0].mxu0 %v167
    %v299 = vpop.f32.mrb[0].mxu0
    %v300 = vadd.f32 %v222, %v299
    %v301 = vpop.f32.mrb[0].mxu0
    %v302 = vadd.f32 %v226, %v301
    %303 = vdwg.mxu0
    %v304 = vxor.u32 %v300, 2147483648
    %v305 = vxor.u32 %v302, 2147483648
    %v306 = vmul.f32 %v304, 1.442695
    %v307 = vpow.pop %v306
    %v308 = vmul.f32 %v305, 1.442695
    %v309 = vpow.pop %v308
    %v310 = vadd.f32 %v307, 1.0
    %v311 = vadd.f32 %v309, 1.0
    %v312 = vrcp.pop %v310
    %v313 = vmul.f32 1.0, %v312
    %v314 = vrcp.pop %v311
    %v315 = vmul.f32 1.0, %v314
    %316 = vst [vmem:[%s5] sm:$0xff] %v313
    %317 = vst [vmem:[%s5 + $0x8] sm:$0xff] %v315
    // Predicated region
    $region38: #{multi_task_heads_forward.1} parent=1 // pred_check
      _
    $region39: #{multi_task_heads_forward.1} parent=1 // pred_check_branch
      %319 = sbr.rel (0) target = $region41
    $region40: #{multi_task_heads_forward.1} parent=1 // pred_region
      _
    $region41: #{multi_task_heads_forward.1} parent=1 // pred_fallthru
      _
    // Predicated region
    $region42: #{multi_task_heads_forward.1} parent=1 // pred_check
      _
    $region43: #{multi_task_heads_forward.1} parent=1 // pred_check_branch
      %321 = sbr.rel (0) target = $region45
    $region44: #{multi_task_heads_forward.1} parent=1 // pred_region
      _
    $region45: #{multi_task_heads_forward.1} parent=1 // pred_fallthru
      _
    %322 = vsyncpa [#allocation3], 1
    %323 = vsyncpa [#allocation5], 1
    %324 = vsyncpa [#allocation8], 1

</llo_original>
